<compile_context>
chip_gen: v5e
topology: v5e:2x2
jax: 0.10.0
libtpu: 0.0.40
codegen_flags: <defaults>
</compile_context>

<pallas_src>
import numpy as np
import jax
import jax.numpy as jnp
from jax.experimental import pallas as pl
from jax.experimental.pallas import tpu as pltpu

QUBITS = 10
EMB_WIRES = 6                    # AmplitudeEmbedding on wires 0..5
N_LAYERS = 5
DIM = 2 ** QUBITS                # 1024
EMB_DIM = 2 ** EMB_WIRES         # 64


# ----------------------------------------------------------------------------
# Parameter setup (plain JAX, input independent):
#   build V (64 x 1024 complex), then collapse circuit + PauliZ into two
#   real symmetric 64x64 quadratic forms fused as [M0 | M1] (64, 128).
# ----------------------------------------------------------------------------
def _rot_matrix(phi, theta, omega):
    # PennyLane Rot(phi, theta, omega) = RZ(omega) RY(theta) RZ(phi)
    c = jnp.cos(theta / 2).astype(jnp.complex64)
    s = jnp.sin(theta / 2).astype(jnp.complex64)
    return jnp.array(
        [[jnp.exp(-0.5j * (phi + omega)) * c, -jnp.exp(0.5j * (phi - omega)) * s],
         [jnp.exp(-0.5j * (phi - omega)) * s,  jnp.exp(0.5j * (phi + omega)) * c]],
        dtype=jnp.complex64,
    )


def _apply_1q(state, mat, wire):
    # state shape: (B,) + (2,)*QUBITS ; wire w lives on axis 1 + w
    ax = 1 + wire
    state = jnp.moveaxis(state, ax, -1)
    state = jnp.matmul(state, mat.T)
    return jnp.moveaxis(state, -1, ax)


_cnot_np = np.zeros((2, 2, 2, 2), dtype=np.complex64)  # [c_out, t_out, c_in, t_in]
for _c in range(2):
    for _t in range(2):
        _cnot_np[_c, _t ^ _c, _c, _t] = 1.0
_CNOT4 = jnp.asarray(_cnot_np)


def _apply_cnot(state, control, target):
    state = jnp.tensordot(state, _CNOT4, axes=((1 + control, 1 + target), (2, 3)))
    return jnp.moveaxis(state, (-2, -1), (1 + control, 1 + target))


def build_transfer_matrix(params):
    """params: (N_LAYERS, QUBITS, 3) f32 -> (64, 2048) f32 = [Re(V) | Im(V)]."""
    # Basis state i of wires 0..5 sits at full-register index 16*i (wire 0 = MSB)
    s0 = np.zeros((EMB_DIM, DIM), dtype=np.complex64)
    s0[np.arange(EMB_DIM), np.arange(EMB_DIM) * (DIM // EMB_DIM)] = 1.0
    state = jnp.asarray(s0).reshape((EMB_DIM,) + (2,) * QUBITS)

    # StronglyEntanglingLayers default entangling ranges
    ranges = [l % (QUBITS - 1) + 1 for l in range(N_LAYERS)]
    for l in range(N_LAYERS):
        for w in range(QUBITS):
            mat = _rot_matrix(params[l, w, 0], params[l, w, 1], params[l, w, 2])
            state = _apply_1q(state, mat, w)
        r = ranges[l]
        for i in range(QUBITS):
            state = _apply_cnot(state, i, (i + r) % QUBITS)

    v = state.reshape(EMB_DIM, DIM)
    return jnp.concatenate(
        [jnp.real(v).astype(jnp.float32), jnp.imag(v).astype(jnp.float32)], axis=-1
    )


def pauli_z_signs():
    """(1024, 2) f32 PauliZ sign map for wires 0 and 1 (wire 0 = MSB)."""
    k = np.arange(DIM)
    signs = np.stack(
        [1.0 - 2.0 * ((k >> (QUBITS - 1 - j)) & 1) for j in range(2)], axis=1
    ).astype(np.float32)
    return jnp.asarray(signs)


def build_quadratic_forms(v_f32):
    """(64, 2048) [Vr|Vi] -> ((64, 128) fused [M0|M1] f32, (128, 2) block-sum S)."""
    vr = v_f32[:, :DIM]
    vi = v_f32[:, DIM:]
    signs = pauli_z_signs()                               # (1024, 2)
    ms = []
    for j in range(2):
        s = signs[:, j][None, :]                          # (1, 1024)
        mj = (vr * s) @ vr.T + (vi * s) @ vi.T            # (64, 64) real symmetric
        ms.append(mj.astype(jnp.float32))
    m_fused = jnp.concatenate(ms, axis=1)                 # (64, 128)

    sel = np.zeros((2 * EMB_DIM, 2), dtype=np.float32)    # block-sum selection
    sel[:EMB_DIM, 0] = 1.0
    sel[EMB_DIM:, 1] = 1.0
    return m_fused, jnp.asarray(sel)


# ----------------------------------------------------------------------------
# Pallas kernel: per-input hot path (all f32)
# ----------------------------------------------------------------------------
def qnn_kernel(x_ref, m_ref, s_ref, o_ref):
    x = x_ref[...]                                             # (TB, 64) f32
    ss = jnp.sum(x * x, axis=-1, keepdims=True)                # ||x||^2, (TB, 1)
    inv = pl.reciprocal(ss + 1e-12, approx=False)              # applied at the end

    # y = x @ [M0 | M1]  -- single tiny MXU matmul, f32 accumulation
    y = jnp.dot(x, m_ref[...], preferred_element_type=jnp.float32)   # (TB, 128)

    # xy = [x | x] * y, then block sums on the (otherwise idle) MXU:
    #   z[:, j] = sum_i x_i * (M_j x)_i
    xy = jnp.concatenate([x, x], axis=-1) * y                  # (TB, 128)
    z = jnp.dot(xy, s_ref[...], preferred_element_type=jnp.float32)  # (TB, 2)

    # Fold AmplitudeEmbedding normalization in as a final per-row 1/||x||^2 scale
    o_ref[...] = z * inv


def _choose_tile(B):
    """Batch tile: large tiles (intermediates are tiny now), >=2 grid steps
    when B > 8 so both v7x TensorCores get work; multiple of 8 rows."""
    MAX_TB = 1024
    if B <= 8:
        return ((B + 7) // 8) * 8
    if B > 2 * MAX_TB:
        return MAX_TB
    half = -(-B // 2)                     # ceil(B / 2) -> grid of (at least) 2
    return max(8, ((half + 7) // 8) * 8)


def qnn_forward(x, m_fused, sel):
    """x: (B, 64) f32, m_fused: (64, 128) f32, sel: (128, 2) f32 -> (B, 2) f32."""
    B = x.shape[0]
    tb = _choose_tile(B)
    bp = pl.cdiv(B, tb) * tb
    if bp != B:
        x = jnp.pad(x, ((0, bp - B), (0, 0)))

    out = pl.pallas_call(
        qnn_kernel,
        out_shape=jax.ShapeDtypeStruct((bp, 2), jnp.float32),
        grid_spec=pltpu.PrefetchScalarGridSpec(
            num_scalar_prefetch=0,
            grid=(bp // tb,),
            in_specs=[
                pl.BlockSpec((tb, EMB_DIM), lambda i: (i, 0)),          # x tile
                pl.BlockSpec((EMB_DIM, 2 * EMB_DIM), lambda i: (0, 0)), # [M0|M1] resident (32 KiB)
                pl.BlockSpec((2 * EMB_DIM, 2), lambda i: (0, 0)),       # S resident (1 KiB)
            ],
            out_specs=pl.BlockSpec((tb, 2), lambda i: (i, 0)),
        ),
        compiler_params=pltpu.CompilerParams(
            dimension_semantics=("parallel",)),
    )(x, m_fused, sel)
    return out[:B]


if __name__ == "__main__":
    key = jax.random.PRNGKey(0)
    k_params, k_x = jax.random.split(key)

    # Deterministic parameter init (torch.nn.init.normal_ -> standard normal)
    params = jax.random.normal(k_params, (N_LAYERS, QUBITS, 3), dtype=jnp.float32)
    # Input: batch of 8 samples, 64 features each (2^6 amplitudes for wires 0..5)
    x = jax.random.normal(k_x, (8, EMB_DIM), dtype=jnp.float32)

    v_f32 = build_transfer_matrix(params)          # (64, 2048) f32 = [Vr | Vi]
    m_fused, sel = build_quadratic_forms(v_f32)    # (64, 128), (128, 2) f32

    out = jax.block_until_ready(qnn_forward(x, m_fused, sel))

    # Pure-JAX f32 full-statevector reference (validates the quadratic-form collapse)
    xn = x / jnp.sqrt(jnp.sum(x * x, axis=-1, keepdims=True))
    vr, vi = v_f32[:, :DIM], v_f32[:, DIM:]
    psi_r = xn @ vr
    psi_i = xn @ vi
    ref = (psi_r * psi_r + psi_i * psi_i) @ pauli_z_signs()

    assert out.shape == (8, 2)
    assert bool(jnp.all(jnp.isfinite(out)))
    np.testing.assert_allclose(np.asarray(out), np.asarray(ref), atol=1e-2, rtol=1e-2)

    print("KERNEL_OK")
</pallas_src>

<mosaic_0001>
module attributes {stable_mosaic.version = 11 : i64} {
  func.func @qnn_kernel(%arg0: i32, %arg1: memref<8x64xf32, #tpu.memory_space<vmem>>, %arg2: memref<64x128xf32, #tpu.memory_space<vmem>>, %arg3: memref<128x2xf32, #tpu.memory_space<vmem>>, %arg4: memref<8x2xf32, #tpu.memory_space<vmem>>) attributes {dimension_semantics = [#tpu.dimension_semantics<parallel>], iteration_bounds = array<i64: 1>, scalar_prefetch = 0 : i64, scratch_operands = 0 : i64, tpu.core_type = #tpu.core_type<tc>, window_params = [{transform_indices = @transform_0, window_bounds = array<i64: 8, 64>}, {pipeline_mode = #tpu.pipeline_mode<synchronous>, transform_indices = @transform_1, window_bounds = array<i64: 64, 128>}, {pipeline_mode = #tpu.pipeline_mode<synchronous>, transform_indices = @transform_2, window_bounds = array<i64: 128, 2>}, {transform_indices = @transform_3, window_bounds = array<i64: 8, 2>}]} {
    %c0 = arith.constant 0 : index
    %c0_0 = arith.constant 0 : index
    %0 = vector.load %arg1[%c0, %c0_0] : memref<8x64xf32, #tpu.memory_space<vmem>>, vector<8x64xf32>
    %1 = arith.mulf %0, %0 : vector<8x64xf32>
    %cst = arith.constant dense<0.000000e+00> : vector<8xf32>
    %2 = vector.multi_reduction <add>, %1, %cst [1] : vector<8x64xf32> to vector<8xf32>
    %3 = vector.shape_cast %2 : vector<8xf32> to vector<8x1xf32>
    %cst_1 = arith.constant 9.99999996E-13 : f32
    %4 = vector.broadcast %cst_1 : f32 to vector<8x1xf32>
    %5 = arith.addf %3, %4 : vector<8x1xf32>
    %6 = tpu.reciprocal %5 : vector<8x1xf32> -> vector<8x1xf32>
    %c0_2 = arith.constant 0 : index
    %c0_3 = arith.constant 0 : index
    %7 = vector.load %arg2[%c0_2, %c0_3] : memref<64x128xf32, #tpu.memory_space<vmem>>, vector<64x128xf32>
    %cst_4 = arith.constant dense<0.000000e+00> : vector<8x128xf32>
    %8 = tpu.matmul %0, %7, %cst_4 {dimension_numbers = #tpu.dot_dimension_numbers<[1], [0], [0], [1], [0, 0, 1, 1], [], []>} : vector<8x64xf32>, vector<64x128xf32>, vector<8x128xf32> -> vector<8x128xf32>
    %9 = tpu.concatenate %0, %0 in 1 : vector<8x64xf32>, vector<8x64xf32> -> vector<8x128xf32>
    %10 = arith.mulf %9, %8 : vector<8x128xf32>
    %c0_5 = arith.constant 0 : index
    %c0_6 = arith.constant 0 : index
    %11 = vector.load %arg3[%c0_5, %c0_6] : memref<128x2xf32, #tpu.memory_space<vmem>>, vector<128x2xf32>
    %cst_7 = arith.constant dense<0.000000e+00> : vector<8x2xf32>
    %12 = tpu.matmul %10, %11, %cst_7 {dimension_numbers = #tpu.dot_dimension_numbers<[1], [0], [0], [1], [0, 0, 1, 1], [], []>} : vector<8x128xf32>, vector<128x2xf32>, vector<8x2xf32> -> vector<8x2xf32>
    %13 = vector.broadcast %6 : vector<8x1xf32> to vector<8x2xf32>
    %14 = arith.mulf %12, %13 : vector<8x2xf32>
    %c0_8 = arith.constant 0 : index
    %c0_9 = arith.constant 0 : index
    %15 = vector.load %arg4[%c0_8, %c0_9] : memref<8x2xf32, #tpu.memory_space<vmem>>, vector<8x2xf32>
    tpu.vector_store %arg4[%c0_8, %c0_9], %14 {strides = array<i32>} : memref<8x2xf32, #tpu.memory_space<vmem>>, vector<8x2xf32>,
    return
  }
  func.func @transform_0(%arg0: i32) -> (i32, i32) {
    %c0_i32 = arith.constant 0 : i32
    %c0_i32_0 = arith.constant 0 : i32
    return %arg0, %c0_i32 : i32, i32
  }
  func.func @transform_1(%arg0: i32) -> (i32, i32) {
    %c0_i32 = arith.constant 0 : i32
    %c0_i32_0 = arith.constant 0 : i32
    %c0_i32_1 = arith.constant 0 : i32
    return %c0_i32, %c0_i32_0 : i32, i32
  }
  func.func @transform_2(%arg0: i32) -> (i32, i32) {
    %c0_i32 = arith.constant 0 : i32
    %c0_i32_0 = arith.constant 0 : i32
    %c0_i32_1 = arith.constant 0 : i32
    return %c0_i32, %c0_i32_0 : i32, i32
  }
  func.func @transform_3(%arg0: i32) -> (i32, i32) {
    %c0_i32 = arith.constant 0 : i32
    %c0_i32_0 = arith.constant 0 : i32
    return %arg0, %c0_i32 : i32, i32
  }
}

</mosaic_0001>

<llo_original>
// kernel: tpu_custom_call.1
$region0: #{tpu_custom_call.1}
  #allocation0 [shape = 'u32[]', space=smem, size = 0x4, offset = 0x4, fixed_abs, tag = 'smem constant byte address 0x4 - core index']
  #allocation1 [shape = 'u32[72,128]{1,0:T(1,128)}', space=vmem, size = 0x9000, scoped, tag = 'internal scratch']
  %s0 = inlined_call_operand.vmem [shape: f32[8,64], index: 0, kind: input, shape index: {}]
  %s1 = inlined_call_operand.vmem [shape: f32[64,128], index: 1, kind: input, shape index: {}]
  %s2 = inlined_call_operand.vmem [shape: f32[128,2], index: 2, kind: input, shape index: {}]
  %s3 = inlined_call_operand.vmem [shape: f32[8,2], index: 3, kind: output, shape index: {}]
  %s4 = sld [smem:[#allocation0]]
  $region22: #{tpu_custom_call.1} parent=0
    _
  %s6 = ssub.s32 1, %s4
  %s7 = scalar_select 0, %s6, %s4
  // Predicated region
  $region2: #{tpu_custom_call.1} parent=0 // pred_check
    _
  $region3: #{tpu_custom_call.1} parent=0 // pred_check_branch
    %9 = sbr.rel (0) target = $region5
  $region4: #{tpu_custom_call.1} parent=0 // pred_region
    _
  $region5: #{tpu_custom_call.1} parent=0 // pred_fallthru
    _
  // Predicated region
  $region6: #{tpu_custom_call.1} parent=0 // pred_check
    _
  $region7: #{tpu_custom_call.1} parent=0 // pred_check_branch
    %11 = sbr.rel (0) target = $region9
  $region8: #{tpu_custom_call.1} parent=0 // pred_region
    _
  $region9: #{tpu_custom_call.1} parent=0 // pred_fallthru
    _
  // Predicated region
  $region10: #{tpu_custom_call.1} parent=0 // pred_check
    _
  $region11: #{tpu_custom_call.1} parent=0 // pred_check_branch
    %13 = sbr.rel (0) target = $region13
  $region12: #{tpu_custom_call.1} parent=0 // pred_region
    _
  $region13: #{tpu_custom_call.1} parent=0 // pred_fallthru
    _
  %v14 = vld [vmem:[%s0] sm:$0xff]
  %v15 = vmul.f32 %v14, %v14
  %vm16 = vcmask 523264
  %v17 = vsel %vm16, %v15, 0.0
  %18 = vadd.xlane.f32.xlu0 %v17
  %v19 = vpop.xlane.xlu0 %18
  %v20 = vadd.f32 %v19, 1e-12
  %v21 = vrcp.pop %v20
  %v22 = vmul.f32 %v20, %v21
  %v23 = vsub.f32 1.0, %v22
  %v24 = vmul.f32 %v21, %v23
  %v25 = vadd.f32 %v21, %v24
  %vm26 = vweird.f32 %v20
  %vm27 = vweird.f32 %v21
  %vm28 = vmor %vm26, %vm27
  %v29 = vsel %vm28, %v21, %v25
  %v30 = vand.u32 2147483647, %v20
  %vm31 = vcmp.eq.f32.partialorder %v30, 8.507059e+37
  %v32 = vand.u32 %v20, 2147483648
  %v33 = vor.u32 1.1754944e-38, %v32
  %v34 = vsel %vm31, %v33, %v29
  %v35 = vld [vmem:[%s1] sm:$0xff]
  %v36 = vld [vmem:[%s1 + $0x8] sm:$0xff]
  %v37 = vld [vmem:[%s1 + $0x10] sm:$0xff]
  %v38 = vld [vmem:[%s1 + $0x18] sm:$0xff]
  %v39 = vld [vmem:[%s1 + $0x20] sm:$0xff]
  %v40 = vld [vmem:[%s1 + $0x28] sm:$0xff]
  %v41 = vld [vmem:[%s1 + $0x30] sm:$0xff]
  %v42 = vld [vmem:[%s1 + $0x38] sm:$0xff]
  %v44 = vsel %vm16, %v14, 0
  %46 = vmatpush.msra.mxu0 0.0
  %47 = vmatpush.msra.mxu0 0.0
  %48 = vmatpush.msra.mxu0 0.0
  %49 = vmatpush.msra.mxu0 0.0
  %50 = vmatpush.msra.mxu0 0.0
  %51 = vmatpush.msra.mxu0 0.0
  %52 = vmatpush.msra.mxu0 0.0
  %53 = vmatpush.msra.mxu0 0.0
  %54 = vmatpush.msra.mxu0 %v42
  %55 = vmatpush.msra.mxu0 %v41
  %56 = vmatpush.msra.mxu0 %v40
  %57 = vmatpush.msra.mxu0 %v39
  %58 = vmatpush.msra.mxu0 %v38
  %59 = vmatpush.msra.mxu0 %v37
  %60 = vmatpush.msra.mxu0 %v36
  %61 = vmatpush.msra.mxu0 %v35
  %62 = vmatmul.f32.gmra.mxu0 %v44
  %v63 = vpop.f32.mrf.mxu0
  %v64 = vadd.f32 0.0, %v63
  %65 = vdwg.mxu0
  %66 = vrot.lane.b32.xlu0 %v14, 64
  %v67 = vpop.permute.xlu0 %66
  %v69 = vsel %vm16, %v14, %v67
  %v70 = vmul.f32 %v69, %v64
  %v71 = vld [vmem:[%s2] sm:$0xff]
  %v72 = vld [vmem:[%s2 + $0x8] sm:$0xff]
  %v73 = vld [vmem:[%s2 + $0x10] sm:$0xff]
  %v74 = vld [vmem:[%s2 + $0x18] sm:$0xff]
  %v75 = vld [vmem:[%s2 + $0x20] sm:$0xff]
  %v76 = vld [vmem:[%s2 + $0x28] sm:$0xff]
  %v77 = vld [vmem:[%s2 + $0x30] sm:$0xff]
  %v78 = vld [vmem:[%s2 + $0x38] sm:$0xff]
  %v79 = vld [vmem:[%s2 + $0x40] sm:$0xff]
  %v80 = vld [vmem:[%s2 + $0x48] sm:$0xff]
  %v81 = vld [vmem:[%s2 + $0x50] sm:$0xff]
  %v82 = vld [vmem:[%s2 + $0x58] sm:$0xff]
  %v83 = vld [vmem:[%s2 + $0x60] sm:$0xff]
  %v84 = vld [vmem:[%s2 + $0x68] sm:$0xff]
  %v85 = vld [vmem:[%s2 + $0x70] sm:$0xff]
  %v86 = vld [vmem:[%s2 + $0x78] sm:$0xff]
  %87 = vmatpush.msra.mxu0 %v86
  %88 = vmatpush.msra.mxu0 %v85
  %89 = vmatpush.msra.mxu0 %v84
  %90 = vmatpush.msra.mxu0 %v83
  %91 = vmatpush.msra.mxu0 %v82
  %92 = vmatpush.msra.mxu0 %v81
  %93 = vmatpush.msra.mxu0 %v80
  %94 = vmatpush.msra.mxu0 %v79
  %95 = vmatpush.msra.mxu0 %v78
  %96 = vmatpush.msra.mxu0 %v77
  %97 = vmatpush.msra.mxu0 %v76
  %98 = vmatpush.msra.mxu0 %v75
  %99 = vmatpush.msra.mxu0 %v74
  %100 = vmatpush.msra.mxu0 %v73
  %101 = vmatpush.msra.mxu0 %v72
  %102 = vmatpush.msra.mxu0 %v71
  %103 = vmatmul.f32.gmra.mxu0 %v70
  %v104 = vpop.f32.mrf.mxu0
  %v105 = vadd.f32 0.0, %v104
  %106 = vdwg.mxu0
  %v107 = vmul.f32 %v105, %v34
  %vm108 = vcmask 15360
  %109 = vst.msk [vmem:[%s3] sm:$0xff] %vm108, %v107
  // Predicated region
  $region14: #{tpu_custom_call.1} parent=0 // pred_check
    _
  $region15: #{tpu_custom_call.1} parent=0 // pred_check_branch
    %111 = sbr.rel (0) target = $region17
  $region16: #{tpu_custom_call.1} parent=0 // pred_region
    _
  $region17: #{tpu_custom_call.1} parent=0 // pred_fallthru
    _
  // Predicated region
  $region18: #{tpu_custom_call.1} parent=0 // pred_check
    _
  $region19: #{tpu_custom_call.1} parent=0 // pred_check_branch
    %113 = sbr.rel (0) target = $region21
  $region20: #{tpu_custom_call.1} parent=0 // pred_region
    _
  $region21: #{tpu_custom_call.1} parent=0 // pred_fallthru
    _

</llo_original>
